<compile_context>
chip_gen: v7x
topology: tpu7x:2x2x1
jax: 0.10.0
libtpu: 0.0.40
codegen_flags: <defaults>
</compile_context>

<pallas_src>
import jax
import jax.numpy as jnp
from jax.experimental import pallas as pl
from jax.experimental.pallas import tpu as pltpu

IN_DIM = 784
H1, H2, H3 = 256, 128, 64
H3_PAD = 128         # lane-dense padded fc3 output / fc4 K dim
N_CLASSES = 10
N_PAD = 128          # lane-dense padded fc4 output width
TM_MAX = 1024        # batch tile (f32 x block = ~3.2 MB; x2 buffers fits everywhere)
NEG_BIG = -1.0e30    # pad-bias value: exp(NEG_BIG - max) == 0, so LSE unaffected


def _mlp_kernel(x_ref, w1_ref, b1_ref, w2_ref, b2_ref, w3_ref, b3_ref,
                w4_ref, b4_ref, o_ref):
    """Fused 4-layer MLP + log_softmax on one (TM, 784) batch tile."""
    # x arrives as f32 straight from HBM; cast to bf16 on the VPU for the MXU.
    x = x_ref[...].astype(jnp.bfloat16)                               # (TM, 784)

    h = jnp.dot(x, w1_ref[...], preferred_element_type=jnp.float32)
    h = jnp.maximum(h + b1_ref[...], 0.0).astype(jnp.bfloat16)        # (TM, 256)
    # dropout(p=0.2) -> identity in eval mode

    h = jnp.dot(h, w2_ref[...], preferred_element_type=jnp.float32)
    h = jnp.maximum(h + b2_ref[...], 0.0).astype(jnp.bfloat16)        # (TM, 128)

    # fc3 padded to 128 columns: pad weight cols / bias are 0 -> ReLU(0)=0,
    # and the matching w4 pad rows are 0, so the padding is numerically exact.
    h = jnp.dot(h, w3_ref[...], preferred_element_type=jnp.float32)
    h = jnp.maximum(h + b3_ref[...], 0.0).astype(jnp.bfloat16)        # (TM, 128)

    # Padded fc4: weight pad columns are 0, bias pad columns are -1e30, so the
    # 118 pad logits never win the max and contribute exp(...) == 0 to the sum.
    logits = jnp.dot(h, w4_ref[...], preferred_element_type=jnp.float32)
    logits = logits + b4_ref[...]                                     # (TM, 128) f32

    m = jnp.max(logits, axis=-1, keepdims=True)
    shifted = logits - m
    lse = jnp.log(jnp.sum(jnp.exp(shifted), axis=-1, keepdims=True))
    o_ref[...] = (shifted - lse).astype(o_ref.dtype)


def _const_spec(shape):
    """Grid-invariant operand: constant block index -> fetched once, stays resident."""
    return pl.BlockSpec(shape, lambda i: (0,) * len(shape))


def _round_up(x, m):
    return ((x + m - 1) // m) * m


@jax.jit
def classifier_forward(x_nchw, params):
    """x_nchw: (B, 1, 28, 28) float32  ->  (B, 10) log-probabilities (float32)."""
    B = x_nchw.shape[0]
    x = x_nchw.reshape(B, -1).astype(jnp.float32)     # (B, 784), fed directly to the kernel

    # Batch-tile selection:
    #  * B >= 32: at least 2 tiles (16-row aligned) so the "parallel" batch axis
    #    actually shards across both TensorCores on v7x; cap at TM_MAX.
    #  * small B: a single tile equal to the full batch dim (always a legal block).
    if B >= 32:
        tm = min(TM_MAX, _round_up((B + 1) // 2, 16))
    else:
        tm = B
    grid = (-(-B // tm),)

    w1, b1, w2, b2, w3, b3, w4, b4 = params

    # bf16 weights (MXU), f32 biases (added on the f32 accumulator).
    w1b = w1.astype(jnp.bfloat16)                                     # (784, 256)
    w2b = w2.astype(jnp.bfloat16)                                     # (256, 128)
    w3p = jnp.zeros((H2, H3_PAD), jnp.bfloat16).at[:, :H3].set(
        w3.astype(jnp.bfloat16))                                      # (128, 128)
    w4p = jnp.zeros((H3_PAD, N_PAD), jnp.bfloat16).at[:H3, :N_CLASSES].set(
        w4.astype(jnp.bfloat16))                                      # (128, 128)
    b1r = b1.reshape(1, H1).astype(jnp.float32)
    b2r = b2.reshape(1, H2).astype(jnp.float32)
    b3p = jnp.zeros((1, H3_PAD), jnp.float32).at[:, :H3].set(
        b3.astype(jnp.float32))
    b4p = jnp.full((1, N_PAD), NEG_BIG, jnp.float32).at[:, :N_CLASSES].set(
        b4.astype(jnp.float32))

    in_specs = [
        pl.BlockSpec((tm, IN_DIM), lambda i: (i, 0)),   # x tile moves with the grid
        _const_spec((IN_DIM, H1)),   _const_spec((1, H1)),
        _const_spec((H1, H2)),       _const_spec((1, H2)),
        _const_spec((H2, H3_PAD)),   _const_spec((1, H3_PAD)),
        _const_spec((H3_PAD, N_PAD)), _const_spec((1, N_PAD)),
    ]

    out_padded = pl.pallas_call(
        _mlp_kernel,
        out_shape=jax.ShapeDtypeStruct((B, N_PAD), jnp.float32),
        grid=grid,
        in_specs=in_specs,
        out_specs=pl.BlockSpec((tm, N_PAD), lambda i: (i, 0)),
        compiler_params=pltpu.CompilerParams(
            dimension_semantics=("parallel",),          # megacore sharding on v7x
            vmem_limit_bytes=32 * 1024 * 1024,          # headroom for TM=1024 f32 x blocks (v5e)
        ),
    )(x, w1b, b1r, w2b, b2r, w3p, b3p, w4p, b4p)

    return out_padded[:, :N_CLASSES]


def init_params(key):
    """Deterministic init mimicking nn.Linear default: U(-1/sqrt(fan_in), +1/sqrt(fan_in))."""
    dims = [(IN_DIM, H1), (H1, H2), (H2, H3), (H3, N_CLASSES)]
    params = []
    for (fan_in, fan_out) in dims:
        key, kw, kb = jax.random.split(key, 3)
        bound = 1.0 / jnp.sqrt(fan_in)
        w = jax.random.uniform(kw, (fan_in, fan_out), jnp.float32, -bound, bound)
        b = jax.random.uniform(kb, (fan_out,), jnp.float32, -bound, bound)
        params.extend([w, b])
    return tuple(params)


def _reference_forward(x_nchw, params):
    """Pure-JAX reference matching the kernel's bf16-input / f32-accum numerics."""
    w1, b1, w2, b2, w3, b3, w4, b4 = params
    x = x_nchw.reshape(x_nchw.shape[0], -1).astype(jnp.bfloat16)

    def layer(h, w, b):
        a = jnp.dot(h, w.astype(jnp.bfloat16), preferred_element_type=jnp.float32)
        return jnp.maximum(a + b, 0.0).astype(jnp.bfloat16)

    h = layer(x, w1, b1)
    h = layer(h, w2, b2)
    h = layer(h, w3, b3)
    logits = jnp.dot(h, w4.astype(jnp.bfloat16),
                     preferred_element_type=jnp.float32) + b4
    return jax.nn.log_softmax(logits, axis=1)


if __name__ == "__main__":
    key = jax.random.PRNGKey(0)
    key, kx = jax.random.split(key)

    params = init_params(key)

    # Primary check: small FashionMNIST-like batch (single tile path).
    B = 2
    x = jax.random.normal(kx, (B, 1, 28, 28), jnp.float32)
    out = jax.block_until_ready(classifier_forward(x, params))
    ref = _reference_forward(x, params)
    assert out.shape == (B, N_CLASSES)
    assert jnp.allclose(out, ref, atol=5e-3, rtol=5e-3), "mismatch vs reference (B=2)"
    assert jnp.allclose(jnp.exp(out).sum(axis=1), 1.0, atol=1e-3)

    # Secondary check: multi-tile + ragged-last-tile path (B=40 -> tm=32, grid=(2,)).
    key, kx2 = jax.random.split(key)
    B2 = 40
    x2 = jax.random.normal(kx2, (B2, 1, 28, 28), jnp.float32)
    out2 = jax.block_until_ready(classifier_forward(x2, params))
    ref2 = _reference_forward(x2, params)
    assert out2.shape == (B2, N_CLASSES)
    assert jnp.allclose(out2, ref2, atol=5e-3, rtol=5e-3), "mismatch vs reference (B=40)"
    assert jnp.allclose(jnp.exp(out2).sum(axis=1), 1.0, atol=1e-3)

    print("KERNEL_OK")
</pallas_src>

<mosaic_0001>
module attributes {stable_mosaic.version = 11 : i64} {
  func.func @_mlp_kernel(%arg0: i32, %arg1: memref<2x784xf32, #tpu.memory_space<vmem>>, %arg2: memref<784x256xbf16, #tpu.memory_space<vmem>>, %arg3: memref<1x256xf32, #tpu.memory_space<vmem>>, %arg4: memref<256x128xbf16, #tpu.memory_space<vmem>>, %arg5: memref<1x128xf32, #tpu.memory_space<vmem>>, %arg6: memref<128x128xbf16, #tpu.memory_space<vmem>>, %arg7: memref<1x128xf32, #tpu.memory_space<vmem>>, %arg8: memref<128x128xbf16, #tpu.memory_space<vmem>>, %arg9: memref<1x128xf32, #tpu.memory_space<vmem>>, %arg10: memref<2x128xf32, #tpu.memory_space<vmem>>) attributes {dimension_semantics = [#tpu.dimension_semantics<parallel>], iteration_bounds = array<i64: 1>, scalar_prefetch = 0 : i64, scratch_operands = 0 : i64, tpu.core_type = #tpu.core_type<tc>, window_params = [{transform_indices = @transform_0, window_bounds = array<i64: 2, 784>}, {pipeline_mode = #tpu.pipeline_mode<synchronous>, transform_indices = @transform_1, window_bounds = array<i64: 784, 256>}, {pipeline_mode = #tpu.pipeline_mode<synchronous>, transform_indices = @transform_2, window_bounds = array<i64: 1, 256>}, {pipeline_mode = #tpu.pipeline_mode<synchronous>, transform_indices = @transform_3, window_bounds = array<i64: 256, 128>}, {pipeline_mode = #tpu.pipeline_mode<synchronous>, transform_indices = @transform_4, window_bounds = array<i64: 1, 128>}, {pipeline_mode = #tpu.pipeline_mode<synchronous>, transform_indices = @transform_5, window_bounds = array<i64: 128, 128>}, {pipeline_mode = #tpu.pipeline_mode<synchronous>, transform_indices = @transform_6, window_bounds = array<i64: 1, 128>}, {pipeline_mode = #tpu.pipeline_mode<synchronous>, transform_indices = @transform_7, window_bounds = array<i64: 128, 128>}, {pipeline_mode = #tpu.pipeline_mode<synchronous>, transform_indices = @transform_8, window_bounds = array<i64: 1, 128>}, {transform_indices = @transform_9, window_bounds = array<i64: 2, 128>}]} {
    %c0 = arith.constant 0 : index
    %c0_0 = arith.constant 0 : index
    %0 = vector.load %arg1[%c0, %c0_0] : memref<2x784xf32, #tpu.memory_space<vmem>>, vector<2x784xf32>
    %1 = arith.truncf %0 : vector<2x784xf32> to vector<2x784xbf16>
    %c0_1 = arith.constant 0 : index
    %c0_2 = arith.constant 0 : index
    %2 = vector.load %arg2[%c0_1, %c0_2] : memref<784x256xbf16, #tpu.memory_space<vmem>>, vector<784x256xbf16>
    %cst = arith.constant dense<0.000000e+00> : vector<2x256xf32>
    %3 = tpu.matmul %1, %2, %cst {dimension_numbers = #tpu.dot_dimension_numbers<[1], [0], [0], [1], [0, 0, 1, 1], [], []>} : vector<2x784xbf16>, vector<784x256xbf16>, vector<2x256xf32> -> vector<2x256xf32>
    %c0_3 = arith.constant 0 : index
    %c0_4 = arith.constant 0 : index
    %4 = vector.load %arg3[%c0_3, %c0_4] : memref<1x256xf32, #tpu.memory_space<vmem>>, vector<1x256xf32>
    %5 = vector.broadcast %4 : vector<1x256xf32> to vector<2x256xf32>
    %6 = arith.addf %3, %5 : vector<2x256xf32>
    %cst_5 = arith.constant 0.000000e+00 : f32
    %7 = vector.broadcast %cst_5 : f32 to vector<2x256xf32>
    %8 = arith.maximumf %6, %7 : vector<2x256xf32>
    %9 = arith.truncf %8 : vector<2x256xf32> to vector<2x256xbf16>
    %c0_6 = arith.constant 0 : index
    %c0_7 = arith.constant 0 : index
    %10 = vector.load %arg4[%c0_6, %c0_7] : memref<256x128xbf16, #tpu.memory_space<vmem>>, vector<256x128xbf16>
    %cst_8 = arith.constant dense<0.000000e+00> : vector<2x128xf32>
    %11 = tpu.matmul %9, %10, %cst_8 {dimension_numbers = #tpu.dot_dimension_numbers<[1], [0], [0], [1], [0, 0, 1, 1], [], []>} : vector<2x256xbf16>, vector<256x128xbf16>, vector<2x128xf32> -> vector<2x128xf32>
    %c0_9 = arith.constant 0 : index
    %c0_10 = arith.constant 0 : index
    %12 = vector.load %arg5[%c0_9, %c0_10] : memref<1x128xf32, #tpu.memory_space<vmem>>, vector<1x128xf32>
    %13 = vector.broadcast %12 : vector<1x128xf32> to vector<2x128xf32>
    %14 = arith.addf %11, %13 : vector<2x128xf32>
    %cst_11 = arith.constant 0.000000e+00 : f32
    %15 = vector.broadcast %cst_11 : f32 to vector<2x128xf32>
    %16 = arith.maximumf %14, %15 : vector<2x128xf32>
    %17 = arith.truncf %16 : vector<2x128xf32> to vector<2x128xbf16>
    %c0_12 = arith.constant 0 : index
    %c0_13 = arith.constant 0 : index
    %18 = vector.load %arg6[%c0_12, %c0_13] : memref<128x128xbf16, #tpu.memory_space<vmem>>, vector<128x128xbf16>
    %cst_14 = arith.constant dense<0.000000e+00> : vector<2x128xf32>
    %19 = tpu.matmul %17, %18, %cst_14 {dimension_numbers = #tpu.dot_dimension_numbers<[1], [0], [0], [1], [0, 0, 1, 1], [], []>} : vector<2x128xbf16>, vector<128x128xbf16>, vector<2x128xf32> -> vector<2x128xf32>
    %c0_15 = arith.constant 0 : index
    %c0_16 = arith.constant 0 : index
    %20 = vector.load %arg7[%c0_15, %c0_16] : memref<1x128xf32, #tpu.memory_space<vmem>>, vector<1x128xf32>
    %21 = vector.broadcast %20 : vector<1x128xf32> to vector<2x128xf32>
    %22 = arith.addf %19, %21 : vector<2x128xf32>
    %cst_17 = arith.constant 0.000000e+00 : f32
    %23 = vector.broadcast %cst_17 : f32 to vector<2x128xf32>
    %24 = arith.maximumf %22, %23 : vector<2x128xf32>
    %25 = arith.truncf %24 : vector<2x128xf32> to vector<2x128xbf16>
    %c0_18 = arith.constant 0 : index
    %c0_19 = arith.constant 0 : index
    %26 = vector.load %arg8[%c0_18, %c0_19] : memref<128x128xbf16, #tpu.memory_space<vmem>>, vector<128x128xbf16>
    %cst_20 = arith.constant dense<0.000000e+00> : vector<2x128xf32>
    %27 = tpu.matmul %25, %26, %cst_20 {dimension_numbers = #tpu.dot_dimension_numbers<[1], [0], [0], [1], [0, 0, 1, 1], [], []>} : vector<2x128xbf16>, vector<128x128xbf16>, vector<2x128xf32> -> vector<2x128xf32>
    %c0_21 = arith.constant 0 : index
    %c0_22 = arith.constant 0 : index
    %28 = vector.load %arg9[%c0_21, %c0_22] : memref<1x128xf32, #tpu.memory_space<vmem>>, vector<1x128xf32>
    %29 = vector.broadcast %28 : vector<1x128xf32> to vector<2x128xf32>
    %30 = arith.addf %27, %29 : vector<2x128xf32>
    %cst_23 = arith.constant dense<0xFF800000> : vector<2xf32>
    %31 = vector.multi_reduction <maximumf>, %30, %cst_23 [1] : vector<2x128xf32> to vector<2xf32>
    %32 = vector.shape_cast %31 : vector<2xf32> to vector<2x1xf32>
    %33 = vector.broadcast %32 : vector<2x1xf32> to vector<2x128xf32>
    %34 = arith.subf %30, %33 : vector<2x128xf32>
    %35 = math.exp %34 : vector<2x128xf32>
    %cst_24 = arith.constant dense<0.000000e+00> : vector<2xf32>
    %36 = vector.multi_reduction <add>, %35, %cst_24 [1] : vector<2x128xf32> to vector<2xf32>
    %37 = vector.shape_cast %36 : vector<2xf32> to vector<2x1xf32>
    %38 = math.log %37 : vector<2x1xf32>
    %39 = vector.broadcast %38 : vector<2x1xf32> to vector<2x128xf32>
    %40 = arith.subf %34, %39 : vector<2x128xf32>
    %c0_25 = arith.constant 0 : index
    %c0_26 = arith.constant 0 : index
    %41 = vector.load %arg10[%c0_25, %c0_26] : memref<2x128xf32, #tpu.memory_space<vmem>>, vector<2x128xf32>
    tpu.vector_store %arg10[%c0_25, %c0_26], %40 {strides = array<i32>} : memref<2x128xf32, #tpu.memory_space<vmem>>, vector<2x128xf32>,
    return
  }
  func.func @transform_0(%arg0: i32) -> (i32, i32) {
    %c0_i32 = arith.constant 0 : i32
    %c0_i32_0 = arith.constant 0 : i32
    return %arg0, %c0_i32 : i32, i32
  }
  func.func @transform_1(%arg0: i32) -> (i32, i32) {
    %c0_i32 = arith.constant 0 : i32
    %c0_i32_0 = arith.constant 0 : i32
    %c0_i32_1 = arith.constant 0 : i32
    return %c0_i32, %c0_i32_0 : i32, i32
  }
  func.func @transform_2(%arg0: i32) -> (i32, i32) {
    %c0_i32 = arith.constant 0 : i32
    %c0_i32_0 = arith.constant 0 : i32
    %c0_i32_1 = arith.constant 0 : i32
    return %c0_i32, %c0_i32_0 : i32, i32
  }
  func.func @transform_3(%arg0: i32) -> (i32, i32) {
    %c0_i32 = arith.constant 0 : i32
    %c0_i32_0 = arith.constant 0 : i32
    %c0_i32_1 = arith.constant 0 : i32
    return %c0_i32, %c0_i32_0 : i32, i32
  }
  func.func @transform_4(%arg0: i32) -> (i32, i32) {
    %c0_i32 = arith.constant 0 : i32
    %c0_i32_0 = arith.constant 0 : i32
    %c0_i32_1 = arith.constant 0 : i32
    return %c0_i32, %c0_i32_0 : i32, i32
  }
  func.func @transform_5(%arg0: i32) -> (i32, i32) {
    %c0_i32 = arith.constant 0 : i32
    %c0_i32_0 = arith.constant 0 : i32
    %c0_i32_1 = arith.constant 0 : i32
    return %c0_i32, %c0_i32_0 : i32, i32
  }
  func.func @transform_6(%arg0: i32) -> (i32, i32) {
    %c0_i32 = arith.constant 0 : i32
    %c0_i32_0 = arith.constant 0 : i32
    %c0_i32_1 = arith.constant 0 : i32
    return %c0_i32, %c0_i32_0 : i32, i32
  }
  func.func @transform_7(%arg0: i32) -> (i32, i32) {
    %c0_i32 = arith.constant 0 : i32
    %c0_i32_0 = arith.constant 0 : i32
    %c0_i32_1 = arith.constant 0 : i32
    return %c0_i32, %c0_i32_0 : i32, i32
  }
  func.func @transform_8(%arg0: i32) -> (i32, i32) {
    %c0_i32 = arith.constant 0 : i32
    %c0_i32_0 = arith.constant 0 : i32
    %c0_i32_1 = arith.constant 0 : i32
    return %c0_i32, %c0_i32_0 : i32, i32
  }
  func.func @transform_9(%arg0: i32) -> (i32, i32) {
    %c0_i32 = arith.constant 0 : i32
    %c0_i32_0 = arith.constant 0 : i32
    return %arg0, %c0_i32 : i32, i32
  }
}

</mosaic_0001>

<llo_original>
// kernel: classifier_forward.1
$region0: #{classifier_forward.1}
  #allocation0 [shape = 'u32[]', space=smem, size = 0x4, offset = 0x4, fixed_abs, tag = 'smem constant byte address 0x4 - core index']
  #allocation1 [shape = 'u32[144,128]{1,0:T(1,128)}', space=vmem, size = 0x12000, scoped, tag = 'internal scratch']
  %s0 = inlined_call_operand.vmem [shape: f32[2,784], index: 0, kind: input, shape index: {}]
  %s1 = inlined_call_operand.vmem [shape: bf16[784,256], index: 1, kind: input, shape index: {}]
  %s2 = inlined_call_operand.vmem [shape: f32[1,256], index: 2, kind: input, shape index: {}]
  %s3 = inlined_call_operand.vmem [shape: bf16[256,128], index: 3, kind: input, shape index: {}]
  %s4 = inlined_call_operand.vmem [shape: f32[1,128], index: 4, kind: input, shape index: {}]
  %s5 = inlined_call_operand.vmem [shape: bf16[128,128], index: 5, kind: input, shape index: {}]
  %s6 = inlined_call_operand.vmem [shape: f32[1,128], index: 6, kind: input, shape index: {}]
  %s7 = inlined_call_operand.vmem [shape: bf16[128,128], index: 7, kind: input, shape index: {}]
  %s8 = inlined_call_operand.vmem [shape: f32[1,128], index: 8, kind: input, shape index: {}]
  %s9 = inlined_call_operand.hbm [shape: f32[2,128], index: 9, kind: output, shape index: {}]
  %s10 = sld [smem:[#allocation0]]
  $region46: #{classifier_forward.1} parent=0
    _
  %s12 = ssub.s32 1, %s10
  %s13 = scalar_select 0, %s12, %s10
  $region1: #{classifier_forward.1} parent=0
    #allocation2 [shape = 'u8[1024]{0}', space=vmem, size = 0x400, scoped, tag = 'output window, operand 0, single buffered']
    #allocation3 [shape = 's32[1]{0}', space=sflag, size = 0x4, scoped, tag = 'scoped memory for classifier_forward.1']
    %14 = vsyncpa [#allocation3], 0
    // Predicated region
    $region2: #{classifier_forward.1} parent=1 // pred_check
      _
    $region3: #{classifier_forward.1} parent=1 // pred_check_branch
      %16 = sbr.rel (0) target = $region5
    $region4: #{classifier_forward.1} parent=1 // pred_region
      _
    $region5: #{classifier_forward.1} parent=1 // pred_fallthru
      _
    // Predicated region
    $region6: #{classifier_forward.1} parent=1 // pred_check
      _
    $region7: #{classifier_forward.1} parent=1 // pred_check_branch
      %18 = sbr.rel (0) target = $region9
    $region8: #{classifier_forward.1} parent=1 // pred_region
      _
    $region9: #{classifier_forward.1} parent=1 // pred_fallthru
      _
    // Predicated region
    $region10: #{classifier_forward.1} parent=1 // pred_check
      _
    $region11: #{classifier_forward.1} parent=1 // pred_check_branch
      %20 = sbr.rel (0) target = $region13
    $region12: #{classifier_forward.1} parent=1 // pred_region
      _
    $region13: #{classifier_forward.1} parent=1 // pred_fallthru
      _
    // Predicated region
    $region14: #{classifier_forward.1} parent=1 // pred_check
      _
    $region15: #{classifier_forward.1} parent=1 // pred_check_branch
      %22 = sbr.rel (0) target = $region17
    $region16: #{classifier_forward.1} parent=1 // pred_region
      _
    $region17: #{classifier_forward.1} parent=1 // pred_fallthru
      _
    // Predicated region
    $region18: #{classifier_forward.1} parent=1 // pred_check
      _
    $region19: #{classifier_forward.1} parent=1 // pred_check_branch
      %24 = sbr.rel (0) target = $region21
    $region20: #{classifier_forward.1} parent=1 // pred_region
      _
    $region21: #{classifier_forward.1} parent=1 // pred_fallthru
      _
    // Predicated region
    $region22: #{classifier_forward.1} parent=1 // pred_check
      _
    $region23: #{classifier_forward.1} parent=1 // pred_check_branch
      %26 = sbr.rel (0) target = $region25
    $region24: #{classifier_forward.1} parent=1 // pred_region
      _
    $region25: #{classifier_forward.1} parent=1 // pred_fallthru
      _
    // Predicated region
    $region26: #{classifier_forward.1} parent=1 // pred_check
      _
    $region27: #{classifier_forward.1} parent=1 // pred_check_branch
      %28 = sbr.rel (0) target = $region29
    $region28: #{classifier_forward.1} parent=1 // pred_region
      _
    $region29: #{classifier_forward.1} parent=1 // pred_fallthru
      _
    // Predicated region
    $region30: #{classifier_forward.1} parent=1 // pred_check
      _
    $region31: #{classifier_forward.1} parent=1 // pred_check_branch
      %30 = sbr.rel (0) target = $region33
    $region32: #{classifier_forward.1} parent=1 // pred_region
      _
    $region33: #{classifier_forward.1} parent=1 // pred_fallthru
      _
    // Predicated region
    $region34: #{classifier_forward.1} parent=1 // pred_check
      _
    $region35: #{classifier_forward.1} parent=1 // pred_check_branch
      %32 = sbr.rel (0) target = $region37
    $region36: #{classifier_forward.1} parent=1 // pred_region
      _
    $region37: #{classifier_forward.1} parent=1 // pred_fallthru
      _
    %v34 = vld [vmem:[%s0] sm:$0xff]
    %v35 = vld [vmem:[%s0 + $0x8] sm:$0x3f]
    %v38 = vcombine.high %v34, %v34
    %v40 = vunpack.c.l.s4 1983009808
    %v41 = vunpack.c.0.s8 %v40
    %v42 = vlaneseq
    %v43 = vshrl.u32 %v42, 7
    %v44 = vsub.s32 %v41, %v43
    %v45 = vrot.slane %v34, %v44
    %v47 = vunpack.c.l.s4 1983009808
    %v48 = vunpack.c.0.s8 %v47
    %v49 = vlaneseq
    %v50 = vshrl.u32 %v49, 7
    %v51 = vsub.s32 %v48, %v50
    %v52 = vrot.slane %v38, %v51
    %v53 = vcombine.high %v45, %v45
    %v54 = vcombine.high %v52, %v52
    %v55 = vcombine.high %v35, %v35
    %v57 = vunpack.c.l.s4 1983009808
    %v58 = vunpack.c.0.s8 %v57
    %v59 = vlaneseq
    %v60 = vshrl.u32 %v59, 7
    %v61 = vsub.s32 %v58, %v60
    %v62 = vrot.slane %v35, %v61
    %v64 = vunpack.c.l.s4 1983009808
    %v65 = vunpack.c.0.s8 %v64
    %v66 = vlaneseq
    %v67 = vshrl.u32 %v66, 7
    %v68 = vsub.s32 %v65, %v67
    %v69 = vrot.slane %v55, %v68
    %v70 = vcombine.high %v62, %v62
    %v78 = vpack.c.bf16 %v45, %v45
    %v79 = vpack.c.bf16 %v53, %v53
    %v80 = vpack.c.bf16 %v52, %v52
    %v81 = vpack.c.bf16 %v54, %v54
    %v82 = vpack.c.bf16 %v62, %v62
    %v83 = vpack.c.bf16 %v70, %v70
    %v84 = vpack.c.bf16 %v69, %v69
    %v85 = vld [vmem:[%s1] sm:$0xff]
    %v86 = vld [vmem:[%s1 + $0x8] sm:$0xff]
    %v87 = vld [vmem:[%s1 + $0x10] sm:$0xff]
    %v88 = vld [vmem:[%s1 + $0x18] sm:$0xff]
    %v89 = vld [vmem:[%s1 + $0x20] sm:$0xff]
    %v90 = vld [vmem:[%s1 + $0x28] sm:$0xff]
    %v91 = vld [vmem:[%s1 + $0x30] sm:$0xff]
    %v92 = vld [vmem:[%s1 + $0x38] sm:$0xff]
    %v93 = vld [vmem:[%s1 + $0x40] sm:$0xff]
    %v94 = vld [vmem:[%s1 + $0x48] sm:$0xff]
    %v95 = vld [vmem:[%s1 + $0x50] sm:$0xff]
    %v96 = vld [vmem:[%s1 + $0x58] sm:$0xff]
    %v97 = vld [vmem:[%s1 + $0x60] sm:$0xff]
    %v98 = vld [vmem:[%s1 + $0x68] sm:$0xff]
    %v99 = vld [vmem:[%s1 + $0x70] sm:$0xff]
    %v100 = vld [vmem:[%s1 + $0x78] sm:$0xff]
    %v101 = vld [vmem:[%s1 + $0x80] sm:$0xff]
    %v102 = vld [vmem:[%s1 + $0x88] sm:$0xff]
    %v103 = vld [vmem:[%s1 + $0x90] sm:$0xff]
    %v104 = vld [vmem:[%s1 + $0x98] sm:$0xff]
    %v105 = vld [vmem:[%s1 + $0xa0] sm:$0xff]
    %v106 = vld [vmem:[%s1 + $0xa8] sm:$0xff]
    %v107 = vld [vmem:[%s1 + $0xb0] sm:$0xff]
    %v108 = vld [vmem:[%s1 + $0xb8] sm:$0xff]
    %v109 = vld [vmem:[%s1 + $0xc0] sm:$0xff]
    %v110 = vld [vmem:[%s1 + $0xc8] sm:$0xff]
    %v111 = vld [vmem:[%s1 + $0xd0] sm:$0xff]
    %v112 = vld [vmem:[%s1 + $0xd8] sm:$0xff]
    %v113 = vld [vmem:[%s1 + $0xe0] sm:$0xff]
    %v114 = vld [vmem:[%s1 + $0xe8] sm:$0xff]
    %v115 = vld [vmem:[%s1 + $0xf0] sm:$0xff]
    %v116 = vld [vmem:[%s1 + $0xf8] sm:$0xff]
    %v117 = vld [vmem:[%s1 + $0x100] sm:$0xff]
    %v118 = vld [vmem:[%s1 + $0x108] sm:$0xff]
    %v119 = vld [vmem:[%s1 + $0x110] sm:$0xff]
    %v120 = vld [vmem:[%s1 + $0x118] sm:$0xff]
    %v121 = vld [vmem:[%s1 + $0x120] sm:$0xff]
    %v122 = vld [vmem:[%s1 + $0x128] sm:$0xff]
    %v123 = vld [vmem:[%s1 + $0x130] sm:$0xff]
    %v124 = vld [vmem:[%s1 + $0x138] sm:$0xff]
    %v125 = vld [vmem:[%s1 + $0x140] sm:$0xff]
    %v126 = vld [vmem:[%s1 + $0x148] sm:$0xff]
    %v127 = vld [vmem:[%s1 + $0x150] sm:$0xff]
    %v128 = vld [vmem:[%s1 + $0x158] sm:$0xff]
    %v129 = vld [vmem:[%s1 + $0x160] sm:$0xff]
    %v130 = vld [vmem:[%s1 + $0x168] sm:$0xff]
    %v131 = vld [vmem:[%s1 + $0x170] sm:$0xff]
    %v132 = vld [vmem:[%s1 + $0x178] sm:$0xff]
    %v133 = vld [vmem:[%s1 + $0x180] sm:$0xff]
    %v134 = vld [vmem:[%s1 + $0x188] sm:$0xff]
    %v135 = vld [vmem:[%s1 + $0x190] sm:$0xff]
    %v136 = vld [vmem:[%s1 + $0x198] sm:$0xff]
    %v137 = vld [vmem:[%s1 + $0x1a0] sm:$0xff]
    %v138 = vld [vmem:[%s1 + $0x1a8] sm:$0xff]
    %v139 = vld [vmem:[%s1 + $0x1b0] sm:$0xff]
    %v140 = vld [vmem:[%s1 + $0x1b8] sm:$0xff]
    %v141 = vld [vmem:[%s1 + $0x1c0] sm:$0xff]
    %v142 = vld [vmem:[%s1 + $0x1c8] sm:$0xff]
    %v143 = vld [vmem:[%s1 + $0x1d0] sm:$0xff]
    %v144 = vld [vmem:[%s1 + $0x1d8] sm:$0xff]
    %v145 = vld [vmem:[%s1 + $0x1e0] sm:$0xff]
    %v146 = vld [vmem:[%s1 + $0x1e8] sm:$0xff]
    %v147 = vld [vmem:[%s1 + $0x1f0] sm:$0xff]
    %v148 = vld [vmem:[%s1 + $0x1f8] sm:$0xff]
    %v149 = vld [vmem:[%s1 + $0x200] sm:$0xff]
    %v150 = vld [vmem:[%s1 + $0x208] sm:$0xff]
    %v151 = vld [vmem:[%s1 + $0x210] sm:$0xff]
    %v152 = vld [vmem:[%s1 + $0x218] sm:$0xff]
    %v153 = vld [vmem:[%s1 + $0x220] sm:$0xff]
    %v154 = vld [vmem:[%s1 + $0x228] sm:$0xff]
    %v155 = vld [vmem:[%s1 + $0x230] sm:$0xff]
    %v156 = vld [vmem:[%s1 + $0x238] sm:$0xff]
    %v157 = vld [vmem:[%s1 + $0x240] sm:$0xff]
    %v158 = vld [vmem:[%s1 + $0x248] sm:$0xff]
    %v159 = vld [vmem:[%s1 + $0x250] sm:$0xff]
    %v160 = vld [vmem:[%s1 + $0x258] sm:$0xff]
    %v161 = vld [vmem:[%s1 + $0x260] sm:$0xff]
    %v162 = vld [vmem:[%s1 + $0x268] sm:$0xff]
    %v163 = vld [vmem:[%s1 + $0x270] sm:$0xff]
    %v164 = vld [vmem:[%s1 + $0x278] sm:$0xff]
    %v165 = vld [vmem:[%s1 + $0x280] sm:$0xff]
    %v166 = vld [vmem:[%s1 + $0x288] sm:$0xff]
    %v167 = vld [vmem:[%s1 + $0x290] sm:$0xff]
    %v168 = vld [vmem:[%s1 + $0x298] sm:$0xff]
    %v169 = vld [vmem:[%s1 + $0x2a0] sm:$0xff]
    %v170 = vld [vmem:[%s1 + $0x2a8] sm:$0xff]
    %v171 = vld [vmem:[%s1 + $0x2b0] sm:$0xff]
    %v172 = vld [vmem:[%s1 + $0x2b8] sm:$0xff]
    %v173 = vld [vmem:[%s1 + $0x2c0] sm:$0xff]
    %v174 = vld [vmem:[%s1 + $0x2c8] sm:$0xff]
    %v175 = vld [vmem:[%s1 + $0x2d0] sm:$0xff]
    %v176 = vld [vmem:[%s1 + $0x2d8] sm:$0xff]
    %v177 = vld [vmem:[%s1 + $0x2e0] sm:$0xff]
    %v178 = vld [vmem:[%s1 + $0x2e8] sm:$0xff]
    %v179 = vld [vmem:[%s1 + $0x2f0] sm:$0xff]
    %v180 = vld [vmem:[%s1 + $0x2f8] sm:$0xff]
    %v181 = vld [vmem:[%s1 + $0x300] sm:$0xff]
    %v182 = vld [vmem:[%s1 + $0x308] sm:$0xff]
    %v183 = vld [vmem:[%s2] sm:$0x3]
    %v185 = vlaneseq
    %v186 = vshrl.u32 %v185, 7
    %v187 = vsub.s32 0, %v186
    %v188 = vrot.slane %v183, %v187
    %v189 = vlaneseq
    %v190 = vshrl.u32 %v189, 7
    %v191 = vsub.s32 1, %v190
    %v192 = vrot.slane %v183, %v191
    %v293 = vunpack.c.l.b16 %v85
    %v294 = vunpack.c.h.b16 %v85
    %v295 = vunpack.c.l.b16 %v86
    %v296 = vunpack.c.h.b16 %v86
    %v297 = vunpack.c.l.b16 %v87
    %v298 = vunpack.c.h.b16 %v87
    %v299 = vunpack.c.l.b16 %v88
    %v300 = vunpack.c.h.b16 %v88
    %v301 = vunpack.c.l.b16 %v89
    %v302 = vunpack.c.h.b16 %v89
    %v303 = vunpack.c.l.b16 %v90
    %v304 = vunpack.c.h.b16 %v90
    %v305 = vunpack.c.l.b16 %v91
    %v306 = vunpack.c.h.b16 %v91
    %v307 = vunpack.c.l.b16 %v92
    %v308 = vunpack.c.h.b16 %v92
    %v309 = vunpack.c.l.b16 %v93
    %v310 = vunpack.c.h.b16 %v93
    %v311 = vunpack.c.l.b16 %v94
    %v312 = vunpack.c.h.b16 %v94
    %v313 = vunpack.c.l.b16 %v95
    %v314 = vunpack.c.h.b16 %v95
    %v315 = vunpack.c.l.b16 %v96
    %v316 = vunpack.c.h.b16 %v96
    %v317 = vunpack.c.l.b16 %v97
    %v318 = vunpack.c.h.b16 %v97
    %v319 = vunpack.c.l.b16 %v98
    %v320 = vunpack.c.h.b16 %v98
    %v321 = vunpack.c.l.b16 %v99
    %v322 = vunpack.c.h.b16 %v99
    %v323 = vunpack.c.l.b16 %v100
    %v324 = vunpack.c.h.b16 %v100
    %v325 = vunpack.c.l.b16 %v101
    %v326 = vunpack.c.h.b16 %v101
    %v327 = vunpack.c.l.b16 %v102
    %v328 = vunpack.c.h.b16 %v102
    %v329 = vunpack.c.l.b16 %v103
    %v330 = vunpack.c.h.b16 %v103
    %v331 = vunpack.c.l.b16 %v104
    %v332 = vunpack.c.h.b16 %v104
    %v333 = vunpack.c.l.b16 %v105
    %v334 = vunpack.c.h.b16 %v105
    %v335 = vunpack.c.l.b16 %v106
    %v336 = vunpack.c.h.b16 %v106
    %v337 = vunpack.c.l.b16 %v107
    %v338 = vunpack.c.h.b16 %v107
    %v339 = vunpack.c.l.b16 %v108
    %v340 = vunpack.c.h.b16 %v108
    %v341 = vunpack.c.l.b16 %v109
    %v342 = vunpack.c.h.b16 %v109
    %v343 = vunpack.c.l.b16 %v110
    %v344 = vunpack.c.h.b16 %v110
    %v345 = vunpack.c.l.b16 %v111
    %v346 = vunpack.c.h.b16 %v111
    %v347 = vunpack.c.l.b16 %v112
    %v348 = vunpack.c.h.b16 %v112
    %v349 = vunpack.c.l.b16 %v113
    %v350 = vunpack.c.h.b16 %v113
    %v351 = vunpack.c.l.b16 %v114
    %v352 = vunpack.c.h.b16 %v114
    %v353 = vunpack.c.l.b16 %v115
    %v354 = vunpack.c.h.b16 %v115
    %v355 = vunpack.c.l.b16 %v116
    %v356 = vunpack.c.h.b16 %v116
    %v357 = vunpack.c.l.b16 %v117
    %v358 = vunpack.c.h.b16 %v117
    %v359 = vunpack.c.l.b16 %v118
    %v360 = vunpack.c.h.b16 %v118
    %v361 = vunpack.c.l.b16 %v119
    %v362 = vunpack.c.h.b16 %v119
    %v363 = vunpack.c.l.b16 %v120
    %v364 = vunpack.c.h.b16 %v120
    %v365 = vunpack.c.l.b16 %v121
    %v366 = vunpack.c.h.b16 %v121
    %v367 = vunpack.c.l.b16 %v122
    %v368 = vunpack.c.h.b16 %v122
    %v369 = vunpack.c.l.b16 %v123
    %v370 = vunpack.c.h.b16 %v123
    %v371 = vunpack.c.l.b16 %v124
    %v372 = vunpack.c.h.b16 %v124
    %v373 = vunpack.c.l.b16 %v125
    %v374 = vunpack.c.h.b16 %v125
    %v375 = vunpack.c.l.b16 %v126
    %v376 = vunpack.c.h.b16 %v126
    %v377 = vunpack.c.l.b16 %v127
    %v378 = vunpack.c.h.b16 %v127
    %v379 = vunpack.c.l.b16 %v128
    %v380 = vunpack.c.h.b16 %v128
    %v381 = vunpack.c.l.b16 %v129
    %v382 = vunpack.c.h.b16 %v129
    %v383 = vunpack.c.l.b16 %v130
    %v384 = vunpack.c.h.b16 %v130
    %v385 = vunpack.c.l.b16 %v131
    %v386 = vunpack.c.h.b16 %v131
    %v387 = vunpack.c.l.b16 %v132
    %v388 = vunpack.c.h.b16 %v132
    %v389 = vunpack.c.l.b16 %v133
    %v390 = vunpack.c.h.b16 %v133
    %v391 = vunpack.c.l.b16 %v134
    %v392 = vunpack.c.h.b16 %v134
    %v393 = vunpack.c.l.b16 %v135
    %v394 = vunpack.c.h.b16 %v135
    %v395 = vunpack.c.l.b16 %v136
    %v396 = vunpack.c.h.b16 %v136
    %v397 = vunpack.c.l.b16 %v137
    %v398 = vunpack.c.h.b16 %v137
    %v399 = vunpack.c.l.b16 %v138
    %v400 = vunpack.c.h.b16 %v138
    %v401 = vunpack.c.l.b16 %v139
    %v402 = vunpack.c.h.b16 %v139
    %v403 = vunpack.c.l.b16 %v140
    %v404 = vunpack.c.h.b16 %v140
    %v405 = vunpack.c.l.b16 %v141
    %v406 = vunpack.c.h.b16 %v141
    %v407 = vunpack.c.l.b16 %v142
    %v408 = vunpack.c.h.b16 %v142
    %v409 = vunpack.c.l.b16 %v143
    %v410 = vunpack.c.h.b16 %v143
    %v411 = vunpack.c.l.b16 %v144
    %v412 = vunpack.c.h.b16 %v144
    %v413 = vunpack.c.l.b16 %v145
    %v414 = vunpack.c.h.b16 %v145
    %v415 = vunpack.c.l.b16 %v146
    %v416 = vunpack.c.h.b16 %v146
    %v417 = vunpack.c.l.b16 %v147
    %v418 = vunpack.c.h.b16 %v147
    %v419 = vunpack.c.l.b16 %v148
    %v420 = vunpack.c.h.b16 %v148
    %v421 = vunpack.c.l.b16 %v149
    %v422 = vunpack.c.h.b16 %v149
    %v423 = vunpack.c.l.b16 %v150
    %v424 = vunpack.c.h.b16 %v150
    %v425 = vunpack.c.l.b16 %v151
    %v426 = vunpack.c.h.b16 %v151
    %v427 = vunpack.c.l.b16 %v152
    %v428 = vunpack.c.h.b16 %v152
    %v429 = vunpack.c.l.b16 %v153
    %v430 = vunpack.c.h.b16 %v153
    %v431 = vunpack.c.l.b16 %v154
    %v432 = vunpack.c.h.b16 %v154
    %v433 = vunpack.c.l.b16 %v155
    %v434 = vunpack.c.h.b16 %v155
    %v435 = vunpack.c.l.b16 %v156
    %v436 = vunpack.c.h.b16 %v156
    %v437 = vunpack.c.l.b16 %v157
    %v438 = vunpack.c.h.b16 %v157
    %v439 = vunpack.c.l.b16 %v158
    %v440 = vunpack.c.h.b16 %v158
    %v441 = vunpack.c.l.b16 %v159
    %v442 = vunpack.c.h.b16 %v159
    %v443 = vunpack.c.l.b16 %v160
    %v444 = vunpack.c.h.b16 %v160
    %v445 = vunpack.c.l.b16 %v161
    %v446 = vunpack.c.h.b16 %v161
    %v447 = vunpack.c.l.b16 %v162
    %v448 = vunpack.c.h.b16 %v162
    %v449 = vunpack.c.l.b16 %v163
    %v450 = vunpack.c.h.b16 %v163
    %v451 = vunpack.c.l.b16 %v164
    %v452 = vunpack.c.h.b16 %v164
    %v453 = vunpack.c.l.b16 %v165
    %v454 = vunpack.c.h.b16 %v165
    %v455 = vunpack.c.l.b16 %v166
    %v456 = vunpack.c.h.b16 %v166
    %v457 = vunpack.c.l.b16 %v167
    %v458 = vunpack.c.h.b16 %v167
    %v459 = vunpack.c.l.b16 %v168
    %v460 = vunpack.c.h.b16 %v168
    %v461 = vunpack.c.l.b16 %v169
    %v462 = vunpack.c.h.b16 %v169
    %v463 = vunpack.c.l.b16 %v170
    %v464 = vunpack.c.h.b16 %v170
    %v465 = vunpack.c.l.b16 %v171
    %v466 = vunpack.c.h.b16 %v171
    %v467 = vunpack.c.l.b16 %v172
    %v468 = vunpack.c.h.b16 %v172
    %v469 = vunpack.c.l.b16 %v173
    %v470 = vunpack.c.h.b16 %v173
    %v471 = vunpack.c.l.b16 %v174
    %v472 = vunpack.c.h.b16 %v174
    %v473 = vunpack.c.l.b16 %v175
    %v474 = vunpack.c.h.b16 %v175
    %v475 = vunpack.c.l.b16 %v176
    %v476 = vunpack.c.h.b16 %v176
    %v477 = vunpack.c.l.b16 %v177
    %v478 = vunpack.c.h.b16 %v177
    %v479 = vunpack.c.l.b16 %v178
    %v480 = vunpack.c.h.b16 %v178
    %v481 = vunpack.c.l.b16 %v179
    %v482 = vunpack.c.h.b16 %v179
    %v483 = vunpack.c.l.b16 %v180
    %v484 = vunpack.c.h.b16 %v180
    %v485 = vunpack.c.l.b16 %v181
    %v486 = vunpack.c.h.b16 %v181
    %v487 = vunpack.c.l.b16 %v182
    %v488 = vunpack.c.h.b16 %v182
    %v489 = vpack.c.b16 %v295, %v293
    %v490 = vpack.c.b16 %v296, %v294
    %v491 = vpack.c.b16 %v299, %v297
    %v492 = vpack.c.b16 %v300, %v298
    %v493 = vpack.c.b16 %v303, %v301
    %v494 = vpack.c.b16 %v304, %v302
    %v495 = vpack.c.b16 %v307, %v305
    %v496 = vpack.c.b16 %v308, %v306
    %v497 = vpack.c.b16 %v311, %v309
    %v498 = vpack.c.b16 %v312, %v310
    %v499 = vpack.c.b16 %v315, %v313
    %v500 = vpack.c.b16 %v316, %v314
    %v501 = vpack.c.b16 %v319, %v317
    %v502 = vpack.c.b16 %v320, %v318
    %v503 = vpack.c.b16 %v323, %v321
    %v504 = vpack.c.b16 %v324, %v322
    %v505 = vpack.c.b16 %v327, %v325
    %v506 = vpack.c.b16 %v328, %v326
    %v507 = vpack.c.b16 %v331, %v329
    %v508 = vpack.c.b16 %v332, %v330
    %v509 = vpack.c.b16 %v335, %v333
    %v510 = vpack.c.b16 %v336, %v334
    %v511 = vpack.c.b16 %v339, %v337
    %v512 = vpack.c.b16 %v340, %v338
    %v513 = vpack.c.b16 %v343, %v341
    %v514 = vpack.c.b16 %v344, %v342
    %v515 = vpack.c.b16 %v347, %v345
    %v516 = vpack.c.b16 %v348, %v346
    %v517 = vpack.c.b16 %v351, %v349
    %v518 = vpack.c.b16 %v352, %v350
    %v519 = vpack.c.b16 %v355, %v353
    %v520 = vpack.c.b16 %v356, %v354
    %v521 = vpack.c.b16 %v359, %v357
    %v522 = vpack.c.b16 %v360, %v358
    %v523 = vpack.c.b16 %v363, %v361
    %v524 = vpack.c.b16 %v364, %v362
    %v525 = vpack.c.b16 %v367, %v365
    %v526 = vpack.c.b16 %v368, %v366
    %v527 = vpack.c.b16 %v371, %v369
    %v528 = vpack.c.b16 %v372, %v370
    %v529 = vpack.c.b16 %v375, %v373
    %v530 = vpack.c.b16 %v376, %v374
    %v531 = vpack.c.b16 %v379, %v377
    %v532 = vpack.c.b16 %v380, %v378
    %v533 = vpack.c.b16 %v383, %v381
    %v534 = vpack.c.b16 %v384, %v382
    %v535 = vpack.c.b16 %v387, %v385
    %v536 = vpack.c.b16 %v388, %v386
    %v537 = vpack.c.b16 %v391, %v389
    %v538 = vpack.c.b16 %v392, %v390
    %v539 = vpack.c.b16 %v395, %v393
    %v540 = vpack.c.b16 %v396, %v394
    %v541 = vpack.c.b16 %v399, %v397
    %v542 = vpack.c.b16 %v400, %v398
    %v543 = vpack.c.b16 %v403, %v401
    %v544 = vpack.c.b16 %v404, %v402
    %v545 = vpack.c.b16 %v407, %v405
    %v546 = vpack.c.b16 %v408, %v406
    %v547 = vpack.c.b16 %v411, %v409
    %v548 = vpack.c.b16 %v412, %v410
    %v549 = vpack.c.b16 %v415, %v413
    %v550 = vpack.c.b16 %v416, %v414
    %v551 = vpack.c.b16 %v419, %v417
    %v552 = vpack.c.b16 %v420, %v418
    %v553 = vpack.c.b16 %v423, %v421
    %v554 = vpack.c.b16 %v424, %v422
    %v555 = vpack.c.b16 %v427, %v425
    %v556 = vpack.c.b16 %v428, %v426
    %v557 = vpack.c.b16 %v431, %v429
    %v558 = vpack.c.b16 %v432, %v430
    %v559 = vpack.c.b16 %v435, %v433
    %v560 = vpack.c.b16 %v436, %v434
    %v561 = vpack.c.b16 %v439, %v437
    %v562 = vpack.c.b16 %v440, %v438
    %v563 = vpack.c.b16 %v443, %v441
    %v564 = vpack.c.b16 %v444, %v442
    %v565 = vpack.c.b16 %v447, %v445
    %v566 = vpack.c.b16 %v448, %v446
    %v567 = vpack.c.b16 %v451, %v449
    %v568 = vpack.c.b16 %v452, %v450
    %v569 = vpack.c.b16 %v455, %v453
    %v570 = vpack.c.b16 %v456, %v454
    %v571 = vpack.c.b16 %v459, %v457
    %v572 = vpack.c.b16 %v460, %v458
    %v573 = vpack.c.b16 %v463, %v461
    %v574 = vpack.c.b16 %v464, %v462
    %v575 = vpack.c.b16 %v467, %v465
    %v576 = vpack.c.b16 %v468, %v466
    %v577 = vpack.c.b16 %v471, %v469
    %v578 = vpack.c.b16 %v472, %v470
    %v579 = vpack.c.b16 %v475, %v473
    %v580 = vpack.c.b16 %v476, %v474
    %v581 = vpack.c.b16 %v479, %v477
    %v582 = vpack.c.b16 %v480, %v478
    %v583 = vpack.c.b16 %v483, %v481
    %v584 = vpack.c.b16 %v484, %v482
    %v585 = vpack.c.b16 %v487, %v485
    %v586 = vpack.c.b16 %v488, %v486
    %vm685 = vcmask 130048
    %v687 = vsel %vm685, %v84, 0
    %689 = vmatprep.subr.bf16.mxu0 %v490
    %690 = vmatpush1.bf16.msra.mxu0 %v489
    %691 = vmatprep.subr.bf16.mxu0 %v492
    %692 = vmatpush1.bf16.msra.mxu0 %v491
    %693 = vmatprep.subr.bf16.mxu0 %v494
    %694 = vmatpush1.bf16.msra.mxu0 %v493
    %695 = vmatprep.subr.bf16.mxu0 %v496
    %696 = vmatpush1.bf16.msra.mxu0 %v495
    %697 = vmatprep.subr.bf16.mxu0 %v498
    %698 = vmatpush1.bf16.msra.mxu0 %v497
    %699 = vmatprep.subr.bf16.mxu0 %v500
    %700 = vmatpush1.bf16.msra.mxu0 %v499
    %701 = vmatprep.subr.bf16.mxu0 %v502
    %702 = vmatpush1.bf16.msra.mxu0 %v501
    %703 = vmatprep.subr.bf16.mxu0 %v504
    %704 = vmatpush1.bf16.msra.mxu0 %v503
    %705 = vmatprep.subr.bf16.mxu0 %v506
    %706 = vmatpush1.bf16.msra.mxu0 %v505
    %707 = vmatprep.subr.bf16.mxu0 %v508
    %708 = vmatpush1.bf16.msra.mxu0 %v507
    %709 = vmatprep.subr.bf16.mxu0 %v510
    %710 = vmatpush1.bf16.msra.mxu0 %v509
    %711 = vmatprep.subr.bf16.mxu0 %v512
    %712 = vmatpush1.bf16.msra.mxu0 %v511
    %713 = vmatprep.subr.bf16.mxu0 %v514
    %714 = vmatpush1.bf16.msra.mxu0 %v513
    %715 = vmatprep.subr.bf16.mxu0 %v516
    %716 = vmatpush1.bf16.msra.mxu0 %v515
    %717 = vmatprep.subr.bf16.mxu0 %v518
    %718 = vmatpush1.bf16.msra.mxu0 %v517
    %719 = vmatprep.subr.bf16.mxu0 %v520
    %720 = vmatpush1.bf16.msra.mxu0 %v519
    %721 = vmatprep.mubr.bf16.mxu0 %v79
    %722 = vmatmul.mubr.bf16.gmra.mrb[0].mxu0 %v78
    %v723 = vpop.f32.mrb[0].mxu0
    %v724 = vadd.f32 %v188, %v723
    %v725 = vpop.f32.mrb[0].mxu0
    %v726 = vadd.f32 %v192, %v725
    %v727 = vpop.f32.mrb[0].mxu0
    %v728 = vpop.f32.mrb[0].mxu0
    %729 = vdwg.mxu0
    %730 = vmatprep.subr.bf16.mxu0 %v522
    %731 = vmatpush1.bf16.msra.mxu0 %v521
    %732 = vmatprep.subr.bf16.mxu0 %v524
    %733 = vmatpush1.bf16.msra.mxu0 %v523
    %734 = vmatprep.subr.bf16.mxu0 %v526
    %735 = vmatpush1.bf16.msra.mxu0 %v525
    %736 = vmatprep.subr.bf16.mxu0 %v528
    %737 = vmatpush1.bf16.msra.mxu0 %v527
    %738 = vmatprep.subr.bf16.mxu0 %v530
    %739 = vmatpush1.bf16.msra.mxu0 %v529
    %740 = vmatprep.subr.bf16.mxu0 %v532
    %741 = vmatpush1.bf16.msra.mxu0 %v531
    %742 = vmatprep.subr.bf16.mxu0 %v534
    %743 = vmatpush1.bf16.msra.mxu0 %v533
    %744 = vmatprep.subr.bf16.mxu0 %v536
    %745 = vmatpush1.bf16.msra.mxu0 %v535
    %746 = vmatprep.subr.bf16.mxu0 %v538
    %747 = vmatpush1.bf16.msra.mxu0 %v537
    %748 = vmatprep.subr.bf16.mxu0 %v540
    %749 = vmatpush1.bf16.msra.mxu0 %v539
    %750 = vmatprep.subr.bf16.mxu0 %v542
    %751 = vmatpush1.bf16.msra.mxu0 %v541
    %752 = vmatprep.subr.bf16.mxu0 %v544
    %753 = vmatpush1.bf16.msra.mxu0 %v543
    %754 = vmatprep.subr.bf16.mxu0 %v546
    %755 = vmatpush1.bf16.msra.mxu0 %v545
    %756 = vmatprep.subr.bf16.mxu0 %v548
    %757 = vmatpush1.bf16.msra.mxu0 %v547
    %758 = vmatprep.subr.bf16.mxu0 %v550
    %759 = vmatpush1.bf16.msra.mxu0 %v549
    %760 = vmatprep.subr.bf16.mxu0 %v552
    %761 = vmatpush1.bf16.msra.mxu0 %v551
    %762 = vmatprep.mubr.bf16.mxu0 %v81
    %763 = vmatmul.mubr.bf16.gmra.mrb[0].mxu0 %v80
    %v764 = vpop.f32.mrb[0].mxu0
    %v765 = vadd.f32 %v724, %v764
    %v766 = vpop.f32.mrb[0].mxu0
    %v767 = vadd.f32 %v726, %v766
    %v768 = vpop.f32.mrb[0].mxu0
    %v769 = vpop.f32.mrb[0].mxu0
    %770 = vdwg.mxu0
    %771 = vmatprep.subr.bf16.mxu0 %v554
    %772 = vmatpush1.bf16.msra.mxu0 %v553
    %773 = vmatprep.subr.bf16.mxu0 %v556
    %774 = vmatpush1.bf16.msra.mxu0 %v555
    %775 = vmatprep.subr.bf16.mxu0 %v558
    %776 = vmatpush1.bf16.msra.mxu0 %v557
    %777 = vmatprep.subr.bf16.mxu0 %v560
    %778 = vmatpush1.bf16.msra.mxu0 %v559
    %779 = vmatprep.subr.bf16.mxu0 %v562
    %780 = vmatpush1.bf16.msra.mxu0 %v561
    %781 = vmatprep.subr.bf16.mxu0 %v564
    %782 = vmatpush1.bf16.msra.mxu0 %v563
    %783 = vmatprep.subr.bf16.mxu0 %v566
    %784 = vmatpush1.bf16.msra.mxu0 %v565
    %785 = vmatprep.subr.bf16.mxu0 %v568
    %786 = vmatpush1.bf16.msra.mxu0 %v567
    %787 = vmatprep.subr.bf16.mxu0 %v570
    %788 = vmatpush1.bf16.msra.mxu0 %v569
    %789 = vmatprep.subr.bf16.mxu0 %v572
    %790 = vmatpush1.bf16.msra.mxu0 %v571
    %791 = vmatprep.subr.bf16.mxu0 %v574
    %792 = vmatpush1.bf16.msra.mxu0 %v573
    %793 = vmatprep.subr.bf16.mxu0 %v576
    %794 = vmatpush1.bf16.msra.mxu0 %v575
    %795 = vmatprep.subr.bf16.mxu0 %v578
    %796 = vmatpush1.bf16.msra.mxu0 %v577
    %797 = vmatprep.subr.bf16.mxu0 %v580
    %798 = vmatpush1.bf16.msra.mxu0 %v579
    %799 = vmatprep.subr.bf16.mxu0 %v582
    %800 = vmatpush1.bf16.msra.mxu0 %v581
    %801 = vmatprep.subr.bf16.mxu0 %v584
    %802 = vmatpush1.bf16.msra.mxu0 %v583
    %803 = vmatprep.mubr.bf16.mxu0 %v83
    %804 = vmatmul.mubr.bf16.gmra.mrb[0].mxu0 %v82
    %v805 = vpop.f32.mrb[0].mxu0
    %v806 = vadd.f32 %v765, %v805
    %v807 = vpop.f32.mrb[0].mxu0
    %v808 = vadd.f32 %v767, %v807
    %v809 = vpop.f32.mrb[0].mxu0
    %v810 = vpop.f32.mrb[0].mxu0
    %811 = vdwg.mxu0
    %812 = vmatprep.subr.bf16.mxu0 %v586
    %813 = vmatpush1.bf16.msra.mxu0 %v585
    %814 = vmatprep.subr.bf16.mxu0 0
    %815 = vmatpush1.bf16.msra.mxu0 0
    %816 = vmatprep.subr.bf16.mxu0 0
    %817 = vmatpush1.bf16.msra.mxu0 0
    %818 = vmatprep.subr.bf16.mxu0 0
    %819 = vmatpush1.bf16.msra.mxu0 0
    %820 = vmatprep.subr.bf16.mxu0 0
    %821 = vmatpush1.bf16.msra.mxu0 0
    %822 = vmatprep.subr.bf16.mxu0 0
    %823 = vmatpush1.bf16.msra.mxu0 0
    %824 = vmatprep.subr.bf16.mxu0 0
    %825 = vmatpush1.bf16.msra.mxu0 0
    %826 = vmatprep.subr.bf16.mxu0 0
    %827 = vmatpush1.bf16.msra.mxu0 0
    %828 = vmatprep.subr.bf16.mxu0 0
    %829 = vmatpush1.bf16.msra.mxu0 0
    %830 = vmatprep.subr.bf16.mxu0 0
    %831 = vmatpush1.bf16.msra.mxu0 0
    %832 = vmatprep.subr.bf16.mxu0 0
    %833 = vmatpush1.bf16.msra.mxu0 0
    %834 = vmatprep.subr.bf16.mxu0 0
    %835 = vmatpush1.bf16.msra.mxu0 0
    %836 = vmatprep.subr.bf16.mxu0 0
    %837 = vmatpush1.bf16.msra.mxu0 0
    %838 = vmatprep.subr.bf16.mxu0 0
    %839 = vmatpush1.bf16.msra.mxu0 0
    %840 = vmatprep.subr.bf16.mxu0 0
    %841 = vmatpush1.bf16.msra.mxu0 0
    %842 = vmatprep.subr.bf16.mxu0 0
    %843 = vmatpush1.bf16.msra.mxu0 0
    %844 = vmatprep.mubr.bf16.mxu0 0
    %845 = vmatmul.mubr.bf16.gmra.mrb[0].mxu0 %v687
    %v846 = vpop.f32.mrb[0].mxu0
    %v847 = vadd.f32 %v806, %v846
    %v848 = vpop.f32.mrb[0].mxu0
    %v849 = vadd.f32 %v808, %v848
    %v850 = vpop.f32.mrb[0].mxu0
    %v851 = vpop.f32.mrb[0].mxu0
    %852 = vdwg.mxu0
    %v853 = vmax.f32 %v847, 0.0
    %v854 = vmax.f32 %v849, 0.0
    %v855 = vpack.c.bf16 %v853, %v853
    %v856 = vpack.c.bf16 %v854, %v854
    %v857 = vld [vmem:[%s3] sm:$0xf]
    %v858 = vld [vmem:[%s3 + $0x4] sm:$0xf]
    %v859 = vld [vmem:[%s3 + $0x8] sm:$0xf]
    %v860 = vld [vmem:[%s3 + $0xc] sm:$0xf]
    %v861 = vld [vmem:[%s3 + $0x10] sm:$0xf]
    %v862 = vld [vmem:[%s3 + $0x14] sm:$0xf]
    %v863 = vld [vmem:[%s3 + $0x18] sm:$0xf]
    %v864 = vld [vmem:[%s3 + $0x1c] sm:$0xf]
    %v865 = vld [vmem:[%s3 + $0x20] sm:$0xf]
    %v866 = vld [vmem:[%s3 + $0x24] sm:$0xf]
    %v867 = vld [vmem:[%s3 + $0x28] sm:$0xf]
    %v868 = vld [vmem:[%s3 + $0x2c] sm:$0xf]
    %v869 = vld [vmem:[%s3 + $0x30] sm:$0xf]
    %v870 = vld [vmem:[%s3 + $0x34] sm:$0xf]
    %v871 = vld [vmem:[%s3 + $0x38] sm:$0xf]
    %v872 = vld [vmem:[%s3 + $0x3c] sm:$0xf]
    %v873 = vld [vmem:[%s3 + $0x40] sm:$0xf]
    %v874 = vld [vmem:[%s3 + $0x44] sm:$0xf]
    %v875 = vld [vmem:[%s3 + $0x48] sm:$0xf]
    %v876 = vld [vmem:[%s3 + $0x4c] sm:$0xf]
    %v877 = vld [vmem:[%s3 + $0x50] sm:$0xf]
    %v878 = vld [vmem:[%s3 + $0x54] sm:$0xf]
    %v879 = vld [vmem:[%s3 + $0x58] sm:$0xf]
    %v880 = vld [vmem:[%s3 + $0x5c] sm:$0xf]
    %v881 = vld [vmem:[%s3 + $0x60] sm:$0xf]
    %v882 = vld [vmem:[%s3 + $0x64] sm:$0xf]
    %v883 = vld [vmem:[%s3 + $0x68] sm:$0xf]
    %v884 = vld [vmem:[%s3 + $0x6c] sm:$0xf]
    %v885 = vld [vmem:[%s3 + $0x70] sm:$0xf]
    %v886 = vld [vmem:[%s3 + $0x74] sm:$0xf]
    %v887 = vld [vmem:[%s3 + $0x78] sm:$0xf]
    %v888 = vld [vmem:[%s3 + $0x7c] sm:$0xf]
    %v889 = vld [vmem:[%s4] sm:$0x1]
    %v891 = vlaneseq
    %v892 = vshrl.u32 %v891, 7
    %v893 = vsub.s32 0, %v892
    %v894 = vrot.slane %v889, %v893
    %v928 = vunpack.c.l.b16 %v857
    %v929 = vunpack.c.l.b16 %v858
    %v930 = vunpack.c.l.b16 %v859
    %v931 = vunpack.c.l.b16 %v860
    %v932 = vunpack.c.l.b16 %v861
    %v933 = vunpack.c.l.b16 %v862
    %v934 = vunpack.c.l.b16 %v863
    %v935 = vunpack.c.l.b16 %v864
    %v936 = vunpack.c.l.b16 %v865
    %v937 = vunpack.c.l.b16 %v866
    %v938 = vunpack.c.l.b16 %v867
    %v939 = vunpack.c.l.b16 %v868
    %v940 = vunpack.c.l.b16 %v869
    %v941 = vunpack.c.l.b16 %v870
    %v942 = vunpack.c.l.b16 %v871
    %v943 = vunpack.c.l.b16 %v872
    %v944 = vunpack.c.l.b16 %v873
    %v945 = vunpack.c.l.b16 %v874
    %v946 = vunpack.c.l.b16 %v875
    %v947 = vunpack.c.l.b16 %v876
    %v948 = vunpack.c.l.b16 %v877
    %v949 = vunpack.c.l.b16 %v878
    %v950 = vunpack.c.l.b16 %v879
    %v951 = vunpack.c.l.b16 %v880
    %v952 = vunpack.c.l.b16 %v881
    %v953 = vunpack.c.l.b16 %v882
    %v954 = vunpack.c.l.b16 %v883
    %v955 = vunpack.c.l.b16 %v884
    %v956 = vunpack.c.l.b16 %v885
    %v957 = vunpack.c.l.b16 %v886
    %v958 = vunpack.c.l.b16 %v887
    %v959 = vunpack.c.l.b16 %v888
    %v960 = vpack.c.b16 %v929, %v928
    %v961 = vpack.c.b16 %v931, %v930
    %v962 = vpack.c.b16 %v933, %v932
    %v963 = vpack.c.b16 %v935, %v934
    %v964 = vpack.c.b16 %v937, %v936
    %v965 = vpack.c.b16 %v939, %v938
    %v966 = vpack.c.b16 %v941, %v940
    %v967 = vpack.c.b16 %v943, %v942
    %v968 = vpack.c.b16 %v945, %v944
    %v969 = vpack.c.b16 %v947, %v946
    %v970 = vpack.c.b16 %v949, %v948
    %v971 = vpack.c.b16 %v951, %v950
    %v972 = vpack.c.b16 %v953, %v952
    %v973 = vpack.c.b16 %v955, %v954
    %v974 = vpack.c.b16 %v957, %v956
    %v975 = vpack.c.b16 %v959, %v958
    %992 = vmatprep.subr.bf16.mxu0 0
    %993 = vmatpush1.bf16.msra.mxu0 %v960
    %994 = vmatprep.subr.bf16.mxu0 0
    %995 = vmatpush1.bf16.msra.mxu0 %v961
    %996 = vmatprep.subr.bf16.mxu0 0
    %997 = vmatpush1.bf16.msra.mxu0 %v962
    %998 = vmatprep.subr.bf16.mxu0 0
    %999 = vmatpush1.bf16.msra.mxu0 %v963
    %1000 = vmatprep.subr.bf16.mxu0 0
    %1001 = vmatpush1.bf16.msra.mxu0 %v964
    %1002 = vmatprep.subr.bf16.mxu0 0
    %1003 = vmatpush1.bf16.msra.mxu0 %v965
    %1004 = vmatprep.subr.bf16.mxu0 0
    %1005 = vmatpush1.bf16.msra.mxu0 %v966
    %1006 = vmatprep.subr.bf16.mxu0 0
    %1007 = vmatpush1.bf16.msra.mxu0 %v967
    %1008 = vmatprep.subr.bf16.mxu0 0
    %1009 = vmatpush1.bf16.msra.mxu0 %v968
    %1010 = vmatprep.subr.bf16.mxu0 0
    %1011 = vmatpush1.bf16.msra.mxu0 %v969
    %1012 = vmatprep.subr.bf16.mxu0 0
    %1013 = vmatpush1.bf16.msra.mxu0 %v970
    %1014 = vmatprep.subr.bf16.mxu0 0
    %1015 = vmatpush1.bf16.msra.mxu0 %v971
    %1016 = vmatprep.subr.bf16.mxu0 0
    %1017 = vmatpush1.bf16.msra.mxu0 %v972
    %1018 = vmatprep.subr.bf16.mxu0 0
    %1019 = vmatpush1.bf16.msra.mxu0 %v973
    %1020 = vmatprep.subr.bf16.mxu0 0
    %1021 = vmatpush1.bf16.msra.mxu0 %v974
    %1022 = vmatprep.subr.bf16.mxu0 0
    %1023 = vmatpush1.bf16.msra.mxu0 %v975
    %1024 = vmatprep.mubr.bf16.mxu0 %v856
    %1025 = vmatmul.mubr.bf16.gmra.mrb[0].mxu0 %v855
    %v1026 = vpop.f32.mrb[0].mxu0
    %v1027 = vadd.f32 %v894, %v1026
    %v1028 = vpop.f32.mrb[0].mxu0
    %v1029 = vpop.f32.mrb[0].mxu0
    %v1030 = vpop.f32.mrb[0].mxu0
    %1031 = vdwg.mxu0
    %v1032 = vmax.f32 %v1027, 0.0
    %v1033 = vpack.c.bf16 %v1032, %v1032
    %v1034 = vld [vmem:[%s5] sm:$0xf]
    %v1035 = vld [vmem:[%s5 + $0x4] sm:$0xf]
    %v1036 = vld [vmem:[%s5 + $0x8] sm:$0xf]
    %v1037 = vld [vmem:[%s5 + $0xc] sm:$0xf]
    %v1038 = vld [vmem:[%s5 + $0x10] sm:$0xf]
    %v1039 = vld [vmem:[%s5 + $0x14] sm:$0xf]
    %v1040 = vld [vmem:[%s5 + $0x18] sm:$0xf]
    %v1041 = vld [vmem:[%s5 + $0x1c] sm:$0xf]
    %v1042 = vld [vmem:[%s5 + $0x20] sm:$0xf]
    %v1043 = vld [vmem:[%s5 + $0x24] sm:$0xf]
    %v1044 = vld [vmem:[%s5 + $0x28] sm:$0xf]
    %v1045 = vld [vmem:[%s5 + $0x2c] sm:$0xf]
    %v1046 = vld [vmem:[%s5 + $0x30] sm:$0xf]
    %v1047 = vld [vmem:[%s5 + $0x34] sm:$0xf]
    %v1048 = vld [vmem:[%s5 + $0x38] sm:$0xf]
    %v1049 = vld [vmem:[%s5 + $0x3c] sm:$0xf]
    %v1050 = vld [vmem:[%s6] sm:$0x1]
    %v1052 = vlaneseq
    %v1053 = vshrl.u32 %v1052, 7
    %v1054 = vsub.s32 0, %v1053
    %v1055 = vrot.slane %v1050, %v1054
    %v1073 = vunpack.c.l.b16 %v1034
    %v1074 = vunpack.c.l.b16 %v1035
    %v1075 = vunpack.c.l.b16 %v1036
    %v1076 = vunpack.c.l.b16 %v1037
    %v1077 = vunpack.c.l.b16 %v1038
    %v1078 = vunpack.c.l.b16 %v1039
    %v1079 = vunpack.c.l.b16 %v1040
    %v1080 = vunpack.c.l.b16 %v1041
    %v1081 = vunpack.c.l.b16 %v1042
    %v1082 = vunpack.c.l.b16 %v1043
    %v1083 = vunpack.c.l.b16 %v1044
    %v1084 = vunpack.c.l.b16 %v1045
    %v1085 = vunpack.c.l.b16 %v1046
    %v1086 = vunpack.c.l.b16 %v1047
    %v1087 = vunpack.c.l.b16 %v1048
    %v1088 = vunpack.c.l.b16 %v1049
    %v1089 = vpack.c.b16 %v1074, %v1073
    %v1090 = vpack.c.b16 %v1076, %v1075
    %v1091 = vpack.c.b16 %v1078, %v1077
    %v1092 = vpack.c.b16 %v1080, %v1079
    %v1093 = vpack.c.b16 %v1082, %v1081
    %v1094 = vpack.c.b16 %v1084, %v1083
    %v1095 = vpack.c.b16 %v1086, %v1085
    %v1096 = vpack.c.b16 %v1088, %v1087
    %1105 = vmatprep.subr.bf16.mxu0 0
    %1106 = vmatpush1.bf16.msra.mxu0 %v1089
    %1107 = vmatprep.subr.bf16.mxu0 0
    %1108 = vmatpush1.bf16.msra.mxu0 %v1090
    %1109 = vmatprep.subr.bf16.mxu0 0
    %1110 = vmatpush1.bf16.msra.mxu0 %v1091
    %1111 = vmatprep.subr.bf16.mxu0 0
    %1112 = vmatpush1.bf16.msra.mxu0 %v1092
    %1113 = vmatprep.subr.bf16.mxu0 0
    %1114 = vmatpush1.bf16.msra.mxu0 %v1093
    %1115 = vmatprep.subr.bf16.mxu0 0
    %1116 = vmatpush1.bf16.msra.mxu0 %v1094
    %1117 = vmatprep.subr.bf16.mxu0 0
    %1118 = vmatpush1.bf16.msra.mxu0 %v1095
    %1119 = vmatprep.subr.bf16.mxu0 0
    %1120 = vmatpush1.bf16.msra.mxu0 %v1096
    %1121 = vmatprep.subr.bf16.mxu0 0
    %1122 = vmatpush1.bf16.msra.mxu0 0
    %1123 = vmatprep.subr.bf16.mxu0 0
    %1124 = vmatpush1.bf16.msra.mxu0 0
    %1125 = vmatprep.subr.bf16.mxu0 0
    %1126 = vmatpush1.bf16.msra.mxu0 0
    %1127 = vmatprep.subr.bf16.mxu0 0
    %1128 = vmatpush1.bf16.msra.mxu0 0
    %1129 = vmatprep.subr.bf16.mxu0 0
    %1130 = vmatpush1.bf16.msra.mxu0 0
    %1131 = vmatprep.subr.bf16.mxu0 0
    %1132 = vmatpush1.bf16.msra.mxu0 0
    %1133 = vmatprep.subr.bf16.mxu0 0
    %1134 = vmatpush1.bf16.msra.mxu0 0
    %1135 = vmatprep.subr.bf16.mxu0 0
    %1136 = vmatpush1.bf16.msra.mxu0 0
    %1137 = vmatprep.mubr.bf16.mxu0 0
    %1138 = vmatmul.mubr.bf16.gmra.mrb[0].mxu0 %v1033
    %v1139 = vpop.f32.mrb[0].mxu0
    %v1140 = vadd.f32 %v1055, %v1139
    %v1141 = vpop.f32.mrb[0].mxu0
    %v1142 = vpop.f32.mrb[0].mxu0
    %v1143 = vpop.f32.mrb[0].mxu0
    %1144 = vdwg.mxu0
    %v1145 = vmax.f32 %v1140, 0.0
    %v1146 = vpack.c.bf16 %v1145, %v1145
    %v1147 = vld [vmem:[%s7] sm:$0xf]
    %v1148 = vld [vmem:[%s7 + $0x4] sm:$0xf]
    %v1149 = vld [vmem:[%s7 + $0x8] sm:$0xf]
    %v1150 = vld [vmem:[%s7 + $0xc] sm:$0xf]
    %v1151 = vld [vmem:[%s7 + $0x10] sm:$0xf]
    %v1152 = vld [vmem:[%s7 + $0x14] sm:$0xf]
    %v1153 = vld [vmem:[%s7 + $0x18] sm:$0xf]
    %v1154 = vld [vmem:[%s7 + $0x1c] sm:$0xf]
    %v1155 = vld [vmem:[%s7 + $0x20] sm:$0xf]
    %v1156 = vld [vmem:[%s7 + $0x24] sm:$0xf]
    %v1157 = vld [vmem:[%s7 + $0x28] sm:$0xf]
    %v1158 = vld [vmem:[%s7 + $0x2c] sm:$0xf]
    %v1159 = vld [vmem:[%s7 + $0x30] sm:$0xf]
    %v1160 = vld [vmem:[%s7 + $0x34] sm:$0xf]
    %v1161 = vld [vmem:[%s7 + $0x38] sm:$0xf]
    %v1162 = vld [vmem:[%s7 + $0x3c] sm:$0xf]
    %v1163 = vld [vmem:[%s8] sm:$0x1]
    %v1165 = vlaneseq
    %v1166 = vshrl.u32 %v1165, 7
    %v1167 = vsub.s32 0, %v1166
    %v1168 = vrot.slane %v1163, %v1167
    %v1186 = vunpack.c.l.b16 %v1147
    %v1187 = vunpack.c.l.b16 %v1148
    %v1188 = vunpack.c.l.b16 %v1149
    %v1189 = vunpack.c.l.b16 %v1150
    %v1190 = vunpack.c.l.b16 %v1151
    %v1191 = vunpack.c.l.b16 %v1152
    %v1192 = vunpack.c.l.b16 %v1153
    %v1193 = vunpack.c.l.b16 %v1154
    %v1194 = vunpack.c.l.b16 %v1155
    %v1195 = vunpack.c.l.b16 %v1156
    %v1196 = vunpack.c.l.b16 %v1157
    %v1197 = vunpack.c.l.b16 %v1158
    %v1198 = vunpack.c.l.b16 %v1159
    %v1199 = vunpack.c.l.b16 %v1160
    %v1200 = vunpack.c.l.b16 %v1161
    %v1201 = vunpack.c.l.b16 %v1162
    %v1202 = vpack.c.b16 %v1187, %v1186
    %v1203 = vpack.c.b16 %v1189, %v1188
    %v1204 = vpack.c.b16 %v1191, %v1190
    %v1205 = vpack.c.b16 %v1193, %v1192
    %v1206 = vpack.c.b16 %v1195, %v1194
    %v1207 = vpack.c.b16 %v1197, %v1196
    %v1208 = vpack.c.b16 %v1199, %v1198
    %v1209 = vpack.c.b16 %v1201, %v1200
    %1218 = vmatprep.subr.bf16.mxu0 0
    %1219 = vmatpush1.bf16.msra.mxu0 %v1202
    %1220 = vmatprep.subr.bf16.mxu0 0
    %1221 = vmatpush1.bf16.msra.mxu0 %v1203
    %1222 = vmatprep.subr.bf16.mxu0 0
    %1223 = vmatpush1.bf16.msra.mxu0 %v1204
    %1224 = vmatprep.subr.bf16.mxu0 0
    %1225 = vmatpush1.bf16.msra.mxu0 %v1205
    %1226 = vmatprep.subr.bf16.mxu0 0
    %1227 = vmatpush1.bf16.msra.mxu0 %v1206
    %1228 = vmatprep.subr.bf16.mxu0 0
    %1229 = vmatpush1.bf16.msra.mxu0 %v1207
    %1230 = vmatprep.subr.bf16.mxu0 0
    %1231 = vmatpush1.bf16.msra.mxu0 %v1208
    %1232 = vmatprep.subr.bf16.mxu0 0
    %1233 = vmatpush1.bf16.msra.mxu0 %v1209
    %1234 = vmatprep.subr.bf16.mxu0 0
    %1235 = vmatpush1.bf16.msra.mxu0 0
    %1236 = vmatprep.subr.bf16.mxu0 0
    %1237 = vmatpush1.bf16.msra.mxu0 0
    %1238 = vmatprep.subr.bf16.mxu0 0
    %1239 = vmatpush1.bf16.msra.mxu0 0
    %1240 = vmatprep.subr.bf16.mxu0 0
    %1241 = vmatpush1.bf16.msra.mxu0 0
    %1242 = vmatprep.subr.bf16.mxu0 0
    %1243 = vmatpush1.bf16.msra.mxu0 0
    %1244 = vmatprep.subr.bf16.mxu0 0
    %1245 = vmatpush1.bf16.msra.mxu0 0
    %1246 = vmatprep.subr.bf16.mxu0 0
    %1247 = vmatpush1.bf16.msra.mxu0 0
    %1248 = vmatprep.subr.bf16.mxu0 0
    %1249 = vmatpush1.bf16.msra.mxu0 0
    %1250 = vmatprep.mubr.bf16.mxu0 0
    %1251 = vmatmul.mubr.bf16.gmra.mrb[0].mxu0 %v1146
    %v1252 = vpop.f32.mrb[0].mxu0
    %v1253 = vadd.f32 %v1168, %v1252
    %v1254 = vpop.f32.mrb[0].mxu0
    %v1255 = vpop.f32.mrb[0].mxu0
    %v1256 = vpop.f32.mrb[0].mxu0
    %1257 = vdwg.mxu0
    %vm1258 = vcmask 1041408
    %v1259 = vsel %vm1258, %v1253, -inf
    %1260 = vmax.xlane.f32.xlu0 %v1259
    %v1261 = vpop.xlane.xlu0 %1260
    %v1262 = vsub.f32 %v1253, %v1261
    %v1263 = vmul.f32 %v1262, 1.442695
    %v1264 = vpow.pop %v1263
    %v1265 = vsel %vm1258, %v1264, 0.0
    %1266 = vadd.xlane.f32.xlu0 %v1265
    %v1267 = vpop.xlane.xlu0 %1266
    %v1268 = vlog2.pop %v1267
    %v1269 = vmul.f32 %v1268, 0.6931472
    %v1270 = vsub.f32 %v1262, %v1269
    %1271 = vst [vmem:[#allocation2] sm:$0x3] %v1270
    // Predicated region
    $region38: #{classifier_forward.1} parent=1 // pred_check
      _
    $region39: #{classifier_forward.1} parent=1 // pred_check_branch
      %1273 = sbr.rel (0) target = $region41
    $region40: #{classifier_forward.1} parent=1 // pred_region
      %s1275 = ssub.s32 32, 32
      %1276 = vsyncadd [#allocation3], %s1275
      %s1278 = sshll.u32 [#allocation2], 4
      %s1279 = int_to_ptr.vmem [resolvable:$true] %s1278
      %1281 = dma.vmem_to_hbm [thread:$0]  %s1279, 32, %s9, [#allocation3]
    $region41: #{classifier_forward.1} parent=1 // pred_fallthru
      _
    // Predicated region
    $region42: #{classifier_forward.1} parent=1 // pred_check
      _
    $region43: #{classifier_forward.1} parent=1 // pred_check_branch
      %1283 = sbr.rel (0) target = $region45
    $region44: #{classifier_forward.1} parent=1 // pred_region
      %1284 = dma.done [#allocation3], 32
    $region45: #{classifier_forward.1} parent=1 // pred_fallthru
      _
    %1285 = vsyncpa [#allocation3], 1

</llo_original>
